<compile_context>
chip_gen: v6e
topology: v6e:2x2x1
jax: 0.10.0
libtpu: 0.0.40
codegen_flags: <defaults>
</compile_context>

<pallas_src>
import jax
import jax.numpy as jnp
from jax.experimental import pallas as pl
from jax.experimental.pallas import tpu as pltpu


def _round_up(n, m):
    return ((n + m - 1) // m) * m


def _pop_spike_decoder_kernel(x_ref, w_ref, b_ref, o_ref):
    # x_ref: (TB, A*P)  w_ref: (A*P, A)  b_ref: (1, A)  o_ref: (TB, A)
    x = x_ref[...].astype(jnp.float32)
    w = w_ref[...].astype(jnp.float32)
    # grouped depthwise "conv" == one small MXU matmul against the
    # block-diagonal weight, accumulated in f32.
    s = jnp.dot(x, w, preferred_element_type=jnp.float32)
    s = s + b_ref[...].astype(jnp.float32)
    o_ref[...] = jnp.tanh(s).astype(o_ref.dtype)


def pop_spike_decoder(pop_act, weight, bias, act_dim, pop_dim, *, block_b=8192):
    """pop_act: any shape flattening to (-1, act_dim*pop_dim); returns (B, act_dim).

    weight: (act_dim, pop_dim) or (act_dim, 1, pop_dim) (torch Conv1d layout).
    bias:   (act_dim,)
    """
    feat = act_dim * pop_dim
    x = pop_act.reshape(-1, feat)          # flat, lane-dense last dim
    B = x.shape[0]

    # Block-diagonal embedding of the depthwise kernel: W_bd[j*P + k, j] = W[j, k]
    w2d = weight.reshape(act_dim, pop_dim)
    eye = jnp.eye(act_dim, dtype=w2d.dtype)                        # (A, A)
    w_bd = (w2d[:, :, None] * eye[:, None, :]).reshape(feat, act_dim)

    b2d = bias.reshape(1, act_dim)

    # Batch tile: multiple of 8 (sublane rule), capped by block_b.
    TB = min(block_b, _round_up(B, 8))
    TB = _round_up(TB, 8)
    Bp = _round_up(B, TB)
    if Bp != B:
        x = jnp.pad(x, ((0, Bp - B), (0, 0)))

    grid = (Bp // TB,)

    out = pl.pallas_call(
        _pop_spike_decoder_kernel,
        out_shape=jax.ShapeDtypeStruct((Bp, act_dim), pop_act.dtype),
        grid_spec=pltpu.PrefetchScalarGridSpec(
            num_scalar_prefetch=0,
            grid=grid,
            in_specs=[
                pl.BlockSpec((TB, feat), lambda i: (i, 0)),       # streamed, pipelined
                pl.BlockSpec((feat, act_dim), lambda i: (0, 0)),  # resident
                pl.BlockSpec((1, act_dim), lambda i: (0, 0)),     # resident
            ],
            out_specs=pl.BlockSpec((TB, act_dim), lambda i: (i, 0)),
        ),
        compiler_params=pltpu.CompilerParams(
            dimension_semantics=("parallel",)),
    )(x, w_bd, b2d)

    return out[:B]


if __name__ == "__main__":
    # Small, module-consistent shapes.
    act_dim = 8     # action dimension
    pop_dim = 16    # population dimension per action
    batch = 4

    key = jax.random.PRNGKey(0)
    k_x, k_w, k_b = jax.random.split(key, 3)

    # Deterministic synthetic parameters (Conv1d weight shape is
    # (act_dim, 1, pop_dim) in torch; squeeze the singleton in-channel dim).
    weight = jax.random.normal(k_w, (act_dim, pop_dim), dtype=jnp.float32) * 0.1
    bias = jax.random.normal(k_b, (act_dim,), dtype=jnp.float32) * 0.1

    # Input population activity, flat as the module would receive it.
    pop_act = jax.random.uniform(k_x, (batch, act_dim * pop_dim), dtype=jnp.float32)

    out = pop_spike_decoder(pop_act, weight, bias, act_dim, pop_dim)
    out = jax.block_until_ready(out)

    # Pure-JAX reference for sanity.
    ref = jnp.tanh(
        jnp.sum(pop_act.reshape(-1, act_dim, pop_dim) * weight[None, :, :], axis=-1)
        + bias[None, :]
    )
    assert out.shape == (batch, act_dim)
    assert jnp.allclose(out, ref, atol=1e-5, rtol=1e-5)

    print("KERNEL_OK")
</pallas_src>

<mosaic_0001>
module attributes {stable_mosaic.version = 11 : i64} {
  func.func @_pop_spike_decoder_kernel(%arg0: i32, %arg1: memref<8x128xf32, #tpu.memory_space<vmem>>, %arg2: memref<128x8xf32, #tpu.memory_space<vmem>>, %arg3: memref<1x8xf32, #tpu.memory_space<vmem>>, %arg4: memref<8x8xf32, #tpu.memory_space<vmem>>) attributes {dimension_semantics = [#tpu.dimension_semantics<parallel>], iteration_bounds = array<i64: 1>, scalar_prefetch = 0 : i64, scratch_operands = 0 : i64, tpu.core_type = #tpu.core_type<tc>, window_params = [{transform_indices = @transform_0, window_bounds = array<i64: 8, 128>}, {pipeline_mode = #tpu.pipeline_mode<synchronous>, transform_indices = @transform_1, window_bounds = array<i64: 128, 8>}, {pipeline_mode = #tpu.pipeline_mode<synchronous>, transform_indices = @transform_2, window_bounds = array<i64: 1, 8>}, {transform_indices = @transform_3, window_bounds = array<i64: 8, 8>}]} {
    %c0 = arith.constant 0 : index
    %c0_0 = arith.constant 0 : index
    %0 = vector.load %arg1[%c0, %c0_0] : memref<8x128xf32, #tpu.memory_space<vmem>>, vector<8x128xf32>
    %c0_1 = arith.constant 0 : index
    %c0_2 = arith.constant 0 : index
    %1 = vector.load %arg2[%c0_1, %c0_2] : memref<128x8xf32, #tpu.memory_space<vmem>>, vector<128x8xf32>
    %cst = arith.constant dense<0.000000e+00> : vector<8x8xf32>
    %2 = tpu.matmul %0, %1, %cst {dimension_numbers = #tpu.dot_dimension_numbers<[1], [0], [0], [1], [0, 0, 1, 1], [], []>} : vector<8x128xf32>, vector<128x8xf32>, vector<8x8xf32> -> vector<8x8xf32>
    %c0_3 = arith.constant 0 : index
    %c0_4 = arith.constant 0 : index
    %3 = vector.load %arg3[%c0_3, %c0_4] : memref<1x8xf32, #tpu.memory_space<vmem>>, vector<1x8xf32>
    %4 = vector.broadcast %3 : vector<1x8xf32> to vector<8x8xf32>
    %5 = arith.addf %2, %4 : vector<8x8xf32>
    %6 = math.tanh %5 : vector<8x8xf32>
    %c0_5 = arith.constant 0 : index
    %c0_6 = arith.constant 0 : index
    %7 = vector.load %arg4[%c0_5, %c0_6] : memref<8x8xf32, #tpu.memory_space<vmem>>, vector<8x8xf32>
    tpu.vector_store %arg4[%c0_5, %c0_6], %6 {strides = array<i32>} : memref<8x8xf32, #tpu.memory_space<vmem>>, vector<8x8xf32>,
    return
  }
  func.func @transform_0(%arg0: i32) -> (i32, i32) {
    %c0_i32 = arith.constant 0 : i32
    %c0_i32_0 = arith.constant 0 : i32
    return %arg0, %c0_i32 : i32, i32
  }
  func.func @transform_1(%arg0: i32) -> (i32, i32) {
    %c0_i32 = arith.constant 0 : i32
    %c0_i32_0 = arith.constant 0 : i32
    %c0_i32_1 = arith.constant 0 : i32
    return %c0_i32, %c0_i32_0 : i32, i32
  }
  func.func @transform_2(%arg0: i32) -> (i32, i32) {
    %c0_i32 = arith.constant 0 : i32
    %c0_i32_0 = arith.constant 0 : i32
    %c0_i32_1 = arith.constant 0 : i32
    return %c0_i32, %c0_i32_0 : i32, i32
  }
  func.func @transform_3(%arg0: i32) -> (i32, i32) {
    %c0_i32 = arith.constant 0 : i32
    %c0_i32_0 = arith.constant 0 : i32
    return %arg0, %c0_i32 : i32, i32
  }
}

</mosaic_0001>

<llo_original>
// kernel: tpu_custom_call.1
$region0: #{tpu_custom_call.1}
  #allocation0 [shape = 'u32[]', space=smem, size = 0x4, offset = 0x4, fixed_abs, tag = 'smem constant byte address 0x4 - core index']
  #allocation1 [shape = 'u32[144,128]{1,0:T(1,128)}', space=vmem, size = 0x12000, scoped, tag = 'internal scratch']
  %s0 = inlined_call_operand.vmem [shape: f32[8,128], index: 0, kind: input, shape index: {}]
  %s1 = inlined_call_operand.vmem [shape: f32[128,8], index: 1, kind: input, shape index: {}]
  %s2 = inlined_call_operand.vmem [shape: f32[1,8], index: 2, kind: input, shape index: {}]
  %s3 = inlined_call_operand.hbm [shape: f32[8,8], index: 3, kind: output, shape index: {}]
  %s4 = sld [smem:[#allocation0]]
  $region22: #{tpu_custom_call.1} parent=0
    _
  %s6 = ssub.s32 1, %s4
  %s7 = scalar_select 0, %s6, %s4
  $region1: #{tpu_custom_call.1} parent=0
    #allocation2 [shape = 'u8[4096]{0}', space=vmem, size = 0x1000, scoped, tag = 'output window, operand 0, single buffered']
    #allocation3 [shape = 's32[1]{0}', space=sflag, size = 0x4, scoped, tag = 'scoped memory for tpu_custom_call.1']
    %8 = vsyncpa [#allocation3], 0
    // Predicated region
    $region2: #{tpu_custom_call.1} parent=1 // pred_check
      _
    $region3: #{tpu_custom_call.1} parent=1 // pred_check_branch
      %10 = sbr.rel (0) target = $region5
    $region4: #{tpu_custom_call.1} parent=1 // pred_region
      _
    $region5: #{tpu_custom_call.1} parent=1 // pred_fallthru
      _
    // Predicated region
    $region6: #{tpu_custom_call.1} parent=1 // pred_check
      _
    $region7: #{tpu_custom_call.1} parent=1 // pred_check_branch
      %12 = sbr.rel (0) target = $region9
    $region8: #{tpu_custom_call.1} parent=1 // pred_region
      _
    $region9: #{tpu_custom_call.1} parent=1 // pred_fallthru
      _
    // Predicated region
    $region10: #{tpu_custom_call.1} parent=1 // pred_check
      _
    $region11: #{tpu_custom_call.1} parent=1 // pred_check_branch
      %14 = sbr.rel (0) target = $region13
    $region12: #{tpu_custom_call.1} parent=1 // pred_region
      _
    $region13: #{tpu_custom_call.1} parent=1 // pred_fallthru
      _
    %v15 = vld [vmem:[%s0] sm:$0xff]
    %v16 = vld [vmem:[%s1] sm:$0xff]
    %v17 = vld [vmem:[%s1 + $0x8] sm:$0xff]
    %v18 = vld [vmem:[%s1 + $0x10] sm:$0xff]
    %v19 = vld [vmem:[%s1 + $0x18] sm:$0xff]
    %v20 = vld [vmem:[%s1 + $0x20] sm:$0xff]
    %v21 = vld [vmem:[%s1 + $0x28] sm:$0xff]
    %v22 = vld [vmem:[%s1 + $0x30] sm:$0xff]
    %v23 = vld [vmem:[%s1 + $0x38] sm:$0xff]
    %v24 = vld [vmem:[%s1 + $0x40] sm:$0xff]
    %v25 = vld [vmem:[%s1 + $0x48] sm:$0xff]
    %v26 = vld [vmem:[%s1 + $0x50] sm:$0xff]
    %v27 = vld [vmem:[%s1 + $0x58] sm:$0xff]
    %v28 = vld [vmem:[%s1 + $0x60] sm:$0xff]
    %v29 = vld [vmem:[%s1 + $0x68] sm:$0xff]
    %v30 = vld [vmem:[%s1 + $0x70] sm:$0xff]
    %v31 = vld [vmem:[%s1 + $0x78] sm:$0xff]
    %v32 = vld [vmem:[%s2] sm:$0x1]
    %v34 = vlaneseq
    %v35 = vshrl.u32 %v34, 7
    %v36 = vsub.s32 0, %v35
    %v37 = vrot.slane %v32, %v36
    %39 = vmatprep.subr.mxu0 0.0
    %40 = vmatpush1.msra.mxu0 %v31
    %41 = vmatprep.subr.mxu0 0.0
    %42 = vmatpush1.msra.mxu0 %v30
    %43 = vmatprep.subr.mxu0 0.0
    %44 = vmatpush1.msra.mxu0 %v29
    %45 = vmatprep.subr.mxu0 0.0
    %46 = vmatpush1.msra.mxu0 %v28
    %47 = vmatprep.subr.mxu0 0.0
    %48 = vmatpush1.msra.mxu0 %v27
    %49 = vmatprep.subr.mxu0 0.0
    %50 = vmatpush1.msra.mxu0 %v26
    %51 = vmatprep.subr.mxu0 0.0
    %52 = vmatpush1.msra.mxu0 %v25
    %53 = vmatprep.subr.mxu0 0.0
    %54 = vmatpush1.msra.mxu0 %v24
    %55 = vmatprep.subr.mxu0 0.0
    %56 = vmatpush1.msra.mxu0 %v23
    %57 = vmatprep.subr.mxu0 0.0
    %58 = vmatpush1.msra.mxu0 %v22
    %59 = vmatprep.subr.mxu0 0.0
    %60 = vmatpush1.msra.mxu0 %v21
    %61 = vmatprep.subr.mxu0 0.0
    %62 = vmatpush1.msra.mxu0 %v20
    %63 = vmatprep.subr.mxu0 0.0
    %64 = vmatpush1.msra.mxu0 %v19
    %65 = vmatprep.subr.mxu0 0.0
    %66 = vmatpush1.msra.mxu0 %v18
    %67 = vmatprep.subr.mxu0 0.0
    %68 = vmatpush1.msra.mxu0 %v17
    %69 = vmatprep.subr.mxu0 0.0
    %70 = vmatpush1.msra.mxu0 %v16
    %71 = vmatprep.subr.mxu0 0.0
    %72 = vmatpush2.msra.mxu0 0.0
    %73 = vmatprep.subr.mxu0 0.0
    %74 = vmatpush2.msra.mxu0 0.0
    %75 = vmatprep.subr.mxu0 0.0
    %76 = vmatpush2.msra.mxu0 0.0
    %77 = vmatprep.subr.mxu0 0.0
    %78 = vmatpush2.msra.mxu0 0.0
    %79 = vmatprep.subr.mxu0 0.0
    %80 = vmatpush2.msra.mxu0 0.0
    %81 = vmatprep.subr.mxu0 0.0
    %82 = vmatpush2.msra.mxu0 0.0
    %83 = vmatprep.subr.mxu0 0.0
    %84 = vmatpush2.msra.mxu0 0.0
    %85 = vmatprep.subr.mxu0 0.0
    %86 = vmatpush2.msra.mxu0 0.0
    %87 = vmatprep.subr.mxu0 0.0
    %88 = vmatpush2.msra.mxu0 0.0
    %89 = vmatprep.subr.mxu0 0.0
    %90 = vmatpush2.msra.mxu0 0.0
    %91 = vmatprep.subr.mxu0 0.0
    %92 = vmatpush2.msra.mxu0 0.0
    %93 = vmatprep.subr.mxu0 0.0
    %94 = vmatpush2.msra.mxu0 0.0
    %95 = vmatprep.subr.mxu0 0.0
    %96 = vmatpush2.msra.mxu0 0.0
    %97 = vmatprep.subr.mxu0 0.0
    %98 = vmatpush2.msra.mxu0 0.0
    %99 = vmatprep.subr.mxu0 0.0
    %100 = vmatpush2.msra.mxu0 0.0
    %101 = vmatprep.subr.mxu0 0.0
    %102 = vmatpush2.msra.mxu0 0.0
    %103 = vmatprep.mubr.f32.mxu0 0.0
    %104 = vmatmul.mubr.f32.gmra.mxu0 %v15
    %v105 = vpop.f32.mrf.mxu0
    %v106 = vadd.f32 %v37, %v105
    %v107 = vpop.f32.mrf.mxu0
    %108 = vdwg.mxu0
    %v109 = vtanh.pop %v106
    %vm110 = vcmask 64512
    %111 = vst.msk [vmem:[#allocation2] sm:$0xff] %vm110, %v109
    // Predicated region
    $region14: #{tpu_custom_call.1} parent=1 // pred_check
      _
    $region15: #{tpu_custom_call.1} parent=1 // pred_check_branch
      %113 = sbr.rel (0) target = $region17
    $region16: #{tpu_custom_call.1} parent=1 // pred_region
      %s115 = ssub.s32 128, 128
      %116 = vsyncadd [#allocation3], %s115
      %s118 = sshll.u32 [#allocation2], 4
      %s119 = int_to_ptr.vmem [resolvable:$true] %s118
      %121 = dma.vmem_to_hbm [thread:$0]  %s119, 128, %s3, [#allocation3]
    $region17: #{tpu_custom_call.1} parent=1 // pred_fallthru
      _
    // Predicated region
    $region18: #{tpu_custom_call.1} parent=1 // pred_check
      _
    $region19: #{tpu_custom_call.1} parent=1 // pred_check_branch
      %123 = sbr.rel (0) target = $region21
    $region20: #{tpu_custom_call.1} parent=1 // pred_region
      %124 = dma.done [#allocation3], 128
    $region21: #{tpu_custom_call.1} parent=1 // pred_fallthru
      _
    %125 = vsyncpa [#allocation3], 1

</llo_original>
